<compile_context>
chip_gen: v7x
topology: tpu7x:2x2x1
jax: 0.10.0
libtpu: 0.0.40
codegen_flags: <defaults>
</compile_context>

<pallas_src>
import jax
import jax.numpy as jnp
from jax import lax
from jax.experimental import pallas as pl
from jax.experimental.pallas import tpu as pltpu


# --------------------------------------------------------------------------- #
# Kernel
# --------------------------------------------------------------------------- #
def _recon_update_kernel(rho_ref, w_ref, kx_ref, minus_ref, multi_ref,
                         out_ref, rhs_ref):
    i = pl.program_id(1)  # W row-tile index (innermost grid axis)

    @pl.when(i == 0)
    def _():
        # rhs[:, j_tile] = rho * (minus - multi)     (pure VPU, once per column tile)
        rho = rho_ref[0, 0]
        diff = (minus_ref[...].astype(jnp.float32)
                - multi_ref[...].astype(jnp.float32))
        rhs_ref[...] = (rho * diff).astype(rhs_ref.dtype)

    # out[i_tile, j_tile] = (K @ input)[i_tile, j_tile] + W[i_tile, :] @ rhs[:, j_tile]
    # bf16 x bf16 -> single-pass MXU with f32 accumulation.
    acc = jnp.dot(w_ref[...], rhs_ref[...], preferred_element_type=jnp.float32)
    out_ref[...] = (kx_ref[...].astype(jnp.float32) + acc).astype(out_ref.dtype)


# --------------------------------------------------------------------------- #
# Tiling / VMEM helpers
# --------------------------------------------------------------------------- #
def _round_up(n, m):
    return ((n + m - 1) // m) * m


def _vmem_capacity_bytes():
    try:
        return int(pltpu.get_tpu_info().vmem_capacity_bytes)
    except Exception:
        return 64 * 1024 * 1024  # conservative: v7x per-TensorCore VMEM


def _vmem_footprint(tS, tT, S_pad, w_bufs, w_itemsize):
    w_blocks = w_bufs * tS * S_pad * w_itemsize      # W row blocks (bf16)
    col_blocks = 2 * 2 * S_pad * tT * 4              # minus/multi, double-buffered f32
    kx_blocks = 2 * tS * tT * 4                      # K@input tiles, double-buffered
    rhs = S_pad * tT * w_itemsize                    # rhs VMEM scratch
    out = 2 * tS * tT * 4                            # output tiles, double-buffered
    return w_blocks + col_blocks + kx_blocks + rhs + out


def _col_tile_candidates(cols_pad, max_col_tile):
    cands = [t for t in range(cols_pad, 127, -128) if cols_pad % t == 0]
    if max_col_tile is not None:
        capped = [t for t in cands if t <= max_col_tile]
        cands = capped or [cands[-1]]
    return cands


def _choose_tiles(S_pad, cols_pad, max_row_tile, max_col_tile, budget, w_itemsize):
    tS = min(_round_up(max_row_tile, 128), S_pad)
    while S_pad % tS:
        tS -= 128

    cands = _col_tile_candidates(cols_pad, max_col_tile)
    if cols_pad >= 256:
        # keep >= 2 column tiles so the "parallel" axis can be sharded across
        # both TensorCores (v7x megacore); cheap on single-core parts.
        two_plus = [t for t in cands if cols_pad // t >= 2]
        if two_plus:
            cands = two_plus

    tT = cands[-1]  # smallest (128-aligned) as fallback
    for t in cands:  # grow tT (the W-reuse factor) as far as VMEM allows
        if _vmem_footprint(tS, t, S_pad, 2, w_itemsize) <= budget:
            tT = t
            break
    while _vmem_footprint(tS, tT, S_pad, 2, w_itemsize) > budget and tS > 128:
        tS -= 128
        while S_pad % tS:
            tS -= 128

    # deepen the W pipeline when there are enough row tiles and VMEM is cheap
    w_bufs = 2
    if S_pad // tS >= 3 and _vmem_footprint(tS, tT, S_pad, 3, w_itemsize) <= budget:
        w_bufs = 3
    return tS, tT, w_bufs


def _w_block_spec(tS, S_pad, w_bufs):
    idx = lambda j, i: (i, 0)
    if w_bufs > 2 and hasattr(pl, "Buffered"):
        try:
            return pl.BlockSpec((tS, S_pad), idx, pipeline_mode=pl.Buffered(w_bufs))
        except TypeError:  # older BlockSpec without pipeline_mode
            pass
    return pl.BlockSpec((tS, S_pad), idx)


def _pad2d(a, rows, cols):
    r, c = a.shape
    if r == rows and c == cols:
        return a
    return jnp.pad(a, ((0, rows - r), (0, cols - c)))


# --------------------------------------------------------------------------- #
# Wrapper (= ReconstructionUpdateLayer.forward)
# --------------------------------------------------------------------------- #
def reconstruction_update_layer(x, L, rho, *, max_row_tile=256,
                                max_col_tile=None, w_dtype=jnp.bfloat16):
    """Pallas implementation of ReconstructionUpdateLayer.forward.

    x: dict with 'input' (M,T) or (B,M,T) and 'minus_output'/'multi_output' of
       shape (S,T) or (B,S,T).  L: (M,S) lead-field matrix.  rho: scalar.
    Returns a new dict with 're_mid_output' added.
    """
    inp = x["input"]
    minus = x["minus_output"]
    multi = x["multi_output"]
    assert minus.shape == multi.shape

    M, S = L.shape
    f32 = jnp.float32
    w_itemsize = jnp.dtype(w_dtype).itemsize

    # ---- constant-per-layer pieces (plain JAX) ------------------------------
    Lf = jnp.asarray(L, f32)
    Lt = Lf.T  # (S, M)
    # TODO(synk): dense matrix inverse (torch.inverse in woodbury_inv) has no
    # Pallas primitive; it depends only on the fixed (L, rho) and is
    # precomputed here in plain JAX (a Cholesky solve would be numerically
    # safer but torch.inverse is what the reference uses).
    W = jnp.linalg.inv(Lt @ Lf + rho * jnp.eye(S, dtype=f32))
    W_k = W.astype(w_dtype)  # stream W through HBM/VMEM/MXU at reduced width
    # Push-through identity: inv(L^T L + rho I) L^T == L^T inv(L L^T + rho I).
    # The well-conditioned (S, M) matrix K carries the precision-critical part.
    K = Lt @ jnp.linalg.inv(Lf @ Lt + rho * jnp.eye(M, dtype=f32))  # (S, M)

    # ---- fold an optional leading batch dim into columns --------------------
    batched = inp.ndim == 3
    if batched:
        B, _, T = inp.shape
        inp2 = jnp.moveaxis(inp, 0, 1).reshape(M, B * T)
        minus2 = jnp.moveaxis(minus, 0, 1).reshape(S, B * T)
        multi2 = jnp.moveaxis(multi, 0, 1).reshape(S, B * T)
    else:
        inp2, minus2, multi2 = inp, minus, multi
    cols = inp2.shape[-1]

    # Small (S,M)x(M,cols) matmul hoisted out of the kernel (M << S).
    KX = jnp.dot(K, inp2.astype(f32), preferred_element_type=f32)  # (S, cols)

    # ---- padding + tiling (per-generation VMEM budget) ----------------------
    S_pad = _round_up(S, 128)
    cols_pad = _round_up(cols, 128)
    capacity = _vmem_capacity_bytes()
    budget = int(0.7 * capacity)  # headroom for compiler-internal scratch
    tS, tT, w_bufs = _choose_tiles(S_pad, cols_pad, max_row_tile, max_col_tile,
                                   budget, w_itemsize)
    footprint = _vmem_footprint(tS, tT, S_pad, w_bufs, w_itemsize)
    vmem_limit = int(min(capacity, max(footprint + (8 << 20), 32 << 20)))

    W_p = _pad2d(W_k, S_pad, S_pad)
    KX_p = _pad2d(KX, S_pad, cols_pad)
    minus_p = _pad2d(minus2, S_pad, cols_pad)
    multi_p = _pad2d(multi2, S_pad, cols_pad)

    grid = (cols_pad // tT, S_pad // tS)  # column tiles outer, row tiles inner
    rho_arr = jnp.asarray(rho, dtype=f32).reshape(1, 1)

    out2 = pl.pallas_call(
        _recon_update_kernel,
        out_shape=jax.ShapeDtypeStruct((S_pad, cols_pad), f32),
        grid_spec=pltpu.PrefetchScalarGridSpec(
            num_scalar_prefetch=0,
            grid=grid,
            in_specs=[
                # rho: tiny scalar in SMEM -> no recompile when rho changes.
                pl.BlockSpec(memory_space=pltpu.MemorySpace.SMEM),
                _w_block_spec(tS, S_pad, w_bufs),                 # W row block
                pl.BlockSpec((tS, tT), lambda j, i: (i, j)),      # K @ input tile
                pl.BlockSpec((S_pad, tT), lambda j, i: (0, j)),   # minus columns
                pl.BlockSpec((S_pad, tT), lambda j, i: (0, j)),   # multi columns
            ],
            out_specs=pl.BlockSpec((tS, tT), lambda j, i: (i, j)),
            scratch_shapes=[pltpu.VMEM((S_pad, tT), W_p.dtype)],  # cached rhs
        ),
        compiler_params=pltpu.CompilerParams(
            dimension_semantics=("parallel", "arbitrary"),
            vmem_limit_bytes=vmem_limit,
        ),
    )(rho_arr, W_p, KX_p, minus_p, multi_p)

    out2 = out2[:S, :cols]
    if batched:
        out = jnp.moveaxis(out2.reshape(S, B, T), 0, 1)
    else:
        out = out2

    new_x = dict(x)
    new_x["re_mid_output"] = out
    return new_x


# --------------------------------------------------------------------------- #
# Self-test
# --------------------------------------------------------------------------- #
if __name__ == "__main__":
    key = jax.random.PRNGKey(0)
    k1, k2, k3, k4 = jax.random.split(key, 4)

    M, S, T = 32, 64, 16  # electrodes, sources, time samples
    rho = 0.1

    L = jax.random.normal(k1, (M, S), dtype=jnp.float32)

    def ref_forward(inp, minus, multi):
        # Pure-JAX fp32 reference mirroring the PyTorch forward exactly.
        Lt = L.T
        W_ref = jnp.linalg.inv(Lt @ L + rho * jnp.eye(S, dtype=jnp.float32))
        rhs = (jnp.dot(Lt, inp, precision=lax.Precision.HIGHEST)
               + rho * (minus - multi))
        return jnp.dot(W_ref, rhs, precision=lax.Precision.HIGHEST)

    def check(out, expected):
        assert out.shape == expected.shape, (out.shape, expected.shape)
        err = float(jnp.max(jnp.abs(out - expected)))
        scale = float(jnp.max(jnp.abs(expected))) + 1e-6
        assert err / scale < 1e-2, (err, scale)

    # ---- unbatched (M,T) / (S,T) ---------------------------------------------
    x = {
        "input": jax.random.normal(k2, (M, T), dtype=jnp.float32),
        "minus_output": jax.random.normal(k3, (S, T), dtype=jnp.float32),
        "multi_output": jax.random.normal(k4, (S, T), dtype=jnp.float32),
    }
    out = jax.block_until_ready(
        reconstruction_update_layer(x, L, rho)["re_mid_output"])
    check(out, ref_forward(x["input"], x["minus_output"], x["multi_output"]))

    # ---- batched (B,M,T) / (B,S,T) --------------------------------------------
    B = 2
    kb1, kb2, kb3 = jax.random.split(jax.random.PRNGKey(1), 3)
    xb = {
        "input": jax.random.normal(kb1, (B, M, T), dtype=jnp.float32),
        "minus_output": jax.random.normal(kb2, (B, S, T), dtype=jnp.float32),
        "multi_output": jax.random.normal(kb3, (B, S, T), dtype=jnp.float32),
    }
    outb = jax.block_until_ready(
        reconstruction_update_layer(xb, L, rho)["re_mid_output"])
    expb = jax.vmap(ref_forward)(xb["input"], xb["minus_output"],
                                 xb["multi_output"])
    check(outb, expb)

    print("KERNEL_OK")
</pallas_src>

<mosaic_0001>
module attributes {stable_mosaic.version = 11 : i64} {
  func.func @_recon_update_kernel(%arg0: i32, %arg1: i32, %arg2: memref<1x1xf32, #tpu.memory_space<smem>>, %arg3: memref<128x128xbf16, #tpu.memory_space<vmem>>, %arg4: memref<128x128xf32, #tpu.memory_space<vmem>>, %arg5: memref<128x128xf32, #tpu.memory_space<vmem>>, %arg6: memref<128x128xf32, #tpu.memory_space<vmem>>, %arg7: memref<128x128xf32, #tpu.memory_space<vmem>>, %arg8: memref<128x128xbf16, #tpu.memory_space<vmem>>) attributes {dimension_semantics = [#tpu.dimension_semantics<parallel>, #tpu.dimension_semantics<arbitrary>], iteration_bounds = array<i64: 1, 1>, scalar_prefetch = 0 : i64, scratch_operands = 1 : i64, tpu.core_type = #tpu.core_type<tc>, window_params = [{transform_indices = @transform_0, window_bounds = array<i64: 1, 1>}, {transform_indices = @transform_1, window_bounds = array<i64: 128, 128>}, {transform_indices = @transform_2, window_bounds = array<i64: 128, 128>}, {transform_indices = @transform_3, window_bounds = array<i64: 128, 128>}, {transform_indices = @transform_4, window_bounds = array<i64: 128, 128>}, {transform_indices = @transform_5, window_bounds = array<i64: 128, 128>}]} {
    %c0_i32 = arith.constant 0 : i32
    %0 = arith.cmpi eq, %arg1, %c0_i32 : i32
    %1 = arith.extui %0 : i1 to i32
    %c0_i32_0 = arith.constant 0 : i32
    %2 = arith.cmpi ne, %1, %c0_i32_0 : i32
    scf.if %2 {
      %c0_8 = arith.constant 0 : index
      %c0_9 = arith.constant 0 : index
      %9 = memref.load %arg2[%c0_8, %c0_9] : memref<1x1xf32, #tpu.memory_space<smem>>
      %c0_10 = arith.constant 0 : index
      %c0_11 = arith.constant 0 : index
      %10 = vector.load %arg5[%c0_10, %c0_11] : memref<128x128xf32, #tpu.memory_space<vmem>>, vector<128x128xf32>
      %c0_12 = arith.constant 0 : index
      %c0_13 = arith.constant 0 : index
      %11 = vector.load %arg6[%c0_12, %c0_13] : memref<128x128xf32, #tpu.memory_space<vmem>>, vector<128x128xf32>
      %12 = arith.subf %10, %11 : vector<128x128xf32>
      %13 = vector.broadcast %9 : f32 to vector<128x128xf32>
      %14 = arith.mulf %13, %12 : vector<128x128xf32>
      %15 = arith.truncf %14 : vector<128x128xf32> to vector<128x128xbf16>
      %c0_14 = arith.constant 0 : index
      %c0_15 = arith.constant 0 : index
      %16 = vector.load %arg8[%c0_14, %c0_15] : memref<128x128xbf16, #tpu.memory_space<vmem>>, vector<128x128xbf16>
      tpu.vector_store %arg8[%c0_14, %c0_15], %15 {strides = array<i32>} : memref<128x128xbf16, #tpu.memory_space<vmem>>, vector<128x128xbf16>,
    } else {
    }
    %c0 = arith.constant 0 : index
    %c0_1 = arith.constant 0 : index
    %3 = vector.load %arg3[%c0, %c0_1] : memref<128x128xbf16, #tpu.memory_space<vmem>>, vector<128x128xbf16>
    %c0_2 = arith.constant 0 : index
    %c0_3 = arith.constant 0 : index
    %4 = vector.load %arg8[%c0_2, %c0_3] : memref<128x128xbf16, #tpu.memory_space<vmem>>, vector<128x128xbf16>
    %cst = arith.constant dense<0.000000e+00> : vector<128x128xf32>
    %5 = tpu.matmul %3, %4, %cst {dimension_numbers = #tpu.dot_dimension_numbers<[1], [0], [0], [1], [0, 0, 1, 1], [], []>} : vector<128x128xbf16>, vector<128x128xbf16>, vector<128x128xf32> -> vector<128x128xf32>
    %c0_4 = arith.constant 0 : index
    %c0_5 = arith.constant 0 : index
    %6 = vector.load %arg4[%c0_4, %c0_5] : memref<128x128xf32, #tpu.memory_space<vmem>>, vector<128x128xf32>
    %7 = arith.addf %6, %5 : vector<128x128xf32>
    %c0_6 = arith.constant 0 : index
    %c0_7 = arith.constant 0 : index
    %8 = vector.load %arg7[%c0_6, %c0_7] : memref<128x128xf32, #tpu.memory_space<vmem>>, vector<128x128xf32>
    tpu.vector_store %arg7[%c0_6, %c0_7], %7 {strides = array<i32>} : memref<128x128xf32, #tpu.memory_space<vmem>>, vector<128x128xf32>,
    return
  }
  func.func @transform_0(%arg0: i32, %arg1: i32) -> (i32, i32) {
    %c0_i32 = arith.constant 0 : i32
    %c0_i32_0 = arith.constant 0 : i32
    %c0_i32_1 = arith.constant 0 : i32
    return %c0_i32, %c0_i32_0 : i32, i32
  }
  func.func @transform_1(%arg0: i32, %arg1: i32) -> (i32, i32) {
    %c0_i32 = arith.constant 0 : i32
    %c0_i32_0 = arith.constant 0 : i32
    return %arg1, %c0_i32 : i32, i32
  }
  func.func @transform_2(%arg0: i32, %arg1: i32) -> (i32, i32) {
    %c0_i32 = arith.constant 0 : i32
    return %arg1, %arg0 : i32, i32
  }
  func.func @transform_3(%arg0: i32, %arg1: i32) -> (i32, i32) {
    %c0_i32 = arith.constant 0 : i32
    %c0_i32_0 = arith.constant 0 : i32
    return %c0_i32, %arg0 : i32, i32
  }
  func.func @transform_4(%arg0: i32, %arg1: i32) -> (i32, i32) {
    %c0_i32 = arith.constant 0 : i32
    %c0_i32_0 = arith.constant 0 : i32
    return %c0_i32, %arg0 : i32, i32
  }
  func.func @transform_5(%arg0: i32, %arg1: i32) -> (i32, i32) {
    %c0_i32 = arith.constant 0 : i32
    return %arg1, %arg0 : i32, i32
  }
}

</mosaic_0001>

<llo_original>
// kernel: tpu_custom_call.1
$region0: #{tpu_custom_call.1}
  #allocation0 [shape = 'u32[]', space=smem, size = 0x4, offset = 0x4, fixed_abs, tag = 'smem constant byte address 0x4 - core index']
  #allocation1 [shape = 'u32[144,128]{1,0:T(1,128)}', space=vmem, size = 0x12000, scoped, tag = 'internal scratch']
  #allocation2 [shape = 'bf16[128,128]{1,0:T(16,128)(2,1)}', space=vmem, size = 0x8000, scoped, tag = 'scratch operand']
  #allocation3 [shape = 'f32[1,1]{1,0:T(1,128)S(6)}', space=smem, size = 0x200, scoped, tag = 'scoped memory for tpu_custom_call.1']
  %s0 = inlined_call_operand.<no memory space> [shape: f32[1,1], index: 0, kind: input, shape index: {}]
  %s1 = inlined_call_operand.hbm [shape: bf16[128,128], index: 1, kind: input, shape index: {}]
  %s2 = inlined_call_operand.hbm [shape: f32[128,128], index: 2, kind: input, shape index: {}]
  %s3 = inlined_call_operand.hbm [shape: f32[128,128], index: 3, kind: input, shape index: {}]
  %s4 = inlined_call_operand.hbm [shape: f32[128,128], index: 4, kind: input, shape index: {}]
  %s5 = inlined_call_operand.hbm [shape: f32[128,128], index: 5, kind: output, shape index: {}]
  %s6 = sld [smem:[#allocation0]]
  $region50: #{tpu_custom_call.1} parent=0
    _
  %s8 = ssub.s32 1, %s6
  %s9 = scalar_select 0, %s8, %s6
  %10 = sst [smem:[#allocation3]] %s0
  $region1: #{tpu_custom_call.1} parent=0
    #allocation4 [shape = 'u8[32768]{0}', space=vmem, size = 0x8000, scoped, tag = 'input window, operand 1, single buffered']
    #allocation5 [shape = 's32[1]{0}', space=sflag, size = 0x4, scoped, tag = 'scoped memory for tpu_custom_call.1']
    #allocation6 [shape = 's32[1]{0}', space=sflag, size = 0x4, scoped, tag = 'scoped memory for tpu_custom_call.1']
    #allocation7 [shape = 'u8[65536]{0}', space=vmem, size = 0x10000, scoped, tag = 'input window, operand 2, single buffered']
    #allocation8 [shape = 's32[1]{0}', space=sflag, size = 0x4, scoped, tag = 'scoped memory for tpu_custom_call.1']
    #allocation9 [shape = 'u8[65536]{0}', space=vmem, size = 0x10000, scoped, tag = 'input window, operand 3, single buffered']
    #allocation10 [shape = 'u8[65536]{0}', space=vmem, size = 0x10000, scoped, tag = 'input window, operand 4, single buffered']
    #allocation11 [shape = 's32[1]{0}', space=sflag, size = 0x4, scoped, tag = 'scoped memory for tpu_custom_call.1']
    #allocation12 [shape = 'u8[65536]{0}', space=vmem, size = 0x10000, scoped, tag = 'output window, operand 0, single buffered']
    %11 = vsyncpa [#allocation5], 0
    %12 = vsyncpa [#allocation8], 0
    %13 = vsyncpa [#allocation11], 0
    %14 = vsyncpa [#allocation6], 0
    // Predicated region
    $region2: #{tpu_custom_call.1} parent=1 // pred_check
      _
    $region3: #{tpu_custom_call.1} parent=1 // pred_check_branch
      %16 = sbr.rel (0) target = $region5
    $region4: #{tpu_custom_call.1} parent=1 // pred_region
      _
    $region5: #{tpu_custom_call.1} parent=1 // pred_fallthru
      _
    // Predicated region
    $region6: #{tpu_custom_call.1} parent=1 // pred_check
      _
    $region7: #{tpu_custom_call.1} parent=1 // pred_check_branch
      %18 = sbr.rel (0) target = $region9
    $region8: #{tpu_custom_call.1} parent=1 // pred_region
      %s20 = ssub.s32 1024, 1024
      %21 = vsyncadd [#allocation5], %s20
      %s22 = sshll.u32 [#allocation4], 4
      %s23 = int_to_ptr.vmem [resolvable:$true] %s22
      %28 = dma.hbm_to_vmem [thread:$0]  %s1, 1024, %s23, [#allocation5], 64, 64, 4
    $region9: #{tpu_custom_call.1} parent=1 // pred_fallthru
      _
    // Predicated region
    $region10: #{tpu_custom_call.1} parent=1 // pred_check
      _
    $region11: #{tpu_custom_call.1} parent=1 // pred_check_branch
      %30 = sbr.rel (0) target = $region13
    $region12: #{tpu_custom_call.1} parent=1 // pred_region
      %s32 = ssub.s32 2048, 2048
      %33 = vsyncadd [#allocation8], %s32
      %s34 = sshll.u32 [#allocation7], 4
      %s35 = int_to_ptr.vmem [resolvable:$true] %s34
      %40 = dma.hbm_to_vmem [thread:$0]  %s2, 2048, %s35, [#allocation8], 128, 128, 8
    $region13: #{tpu_custom_call.1} parent=1 // pred_fallthru
      _
    // Predicated region
    $region14: #{tpu_custom_call.1} parent=1 // pred_check
      _
    $region15: #{tpu_custom_call.1} parent=1 // pred_check_branch
      %42 = sbr.rel (0) target = $region17
    $region16: #{tpu_custom_call.1} parent=1 // pred_region
      %s44 = ssub.s32 2048, 2048
      %45 = vsyncadd [#allocation8], %s44
      %s46 = sshll.u32 [#allocation9], 4
      %s47 = int_to_ptr.vmem [resolvable:$true] %s46
      %52 = dma.hbm_to_vmem [thread:$0]  %s3, 2048, %s47, [#allocation8], 128, 128, 8
    $region17: #{tpu_custom_call.1} parent=1 // pred_fallthru
      _
    // Predicated region
    $region18: #{tpu_custom_call.1} parent=1 // pred_check
      _
    $region19: #{tpu_custom_call.1} parent=1 // pred_check_branch
      %54 = sbr.rel (0) target = $region21
    $region20: #{tpu_custom_call.1} parent=1 // pred_region
      %s56 = ssub.s32 2048, 2048
      %57 = vsyncadd [#allocation11], %s56
      %s58 = sshll.u32 [#allocation10], 4
      %s59 = int_to_ptr.vmem [resolvable:$true] %s58
      %64 = dma.hbm_to_vmem [thread:$0]  %s4, 2048, %s59, [#allocation11], 128, 128, 8
    $region21: #{tpu_custom_call.1} parent=1 // pred_fallthru
      _
    // Predicated region
    $region22: #{tpu_custom_call.1} parent=1 // pred_check
      _
    $region23: #{tpu_custom_call.1} parent=1 // pred_check_branch
      %66 = sbr.rel (0) target = $region25
    $region24: #{tpu_custom_call.1} parent=1 // pred_region
      %67 = dma.done [#allocation5], 1024
    $region25: #{tpu_custom_call.1} parent=1 // pred_fallthru
      _
    // Predicated region
    $region26: #{tpu_custom_call.1} parent=1 // pred_check
      _
    $region27: #{tpu_custom_call.1} parent=1 // pred_check_branch
      %69 = sbr.rel (0) target = $region29
    $region28: #{tpu_custom_call.1} parent=1 // pred_region
      %70 = dma.done [#allocation8], 2048
    $region29: #{tpu_custom_call.1} parent=1 // pred_fallthru
      _
    // Predicated region
    $region30: #{tpu_custom_call.1} parent=1 // pred_check
      _
    $region31: #{tpu_custom_call.1} parent=1 // pred_check_branch
      %72 = sbr.rel (0) target = $region33
    $region32: #{tpu_custom_call.1} parent=1 // pred_region
      %73 = dma.done [#allocation8], 2048
    $region33: #{tpu_custom_call.1} parent=1 // pred_fallthru
      _
    // Predicated region
    $region34: #{tpu_custom_call.1} parent=1 // pred_check
      _
    $region35: #{tpu_custom_call.1} parent=1 // pred_check_branch
      %75 = sbr.rel (0) target = $region37
    $region36: #{tpu_custom_call.1} parent=1 // pred_region
      %76 = dma.done [#allocation11], 2048
    $region37: #{tpu_custom_call.1} parent=1 // pred_fallthru
      _
    %p78 = scmp.eq.s32.totalorder 0, 0
    // Predicated region
    $region38: #{tpu_custom_call.1} parent=1 // pred_check
      %p79 = pneg %p78
    $region39: #{tpu_custom_call.1} parent=1 // pred_check_branch
      %81 = sbr.rel (%p79) target = $region41
    $region40: #{tpu_custom_call.1} parent=1 // pred_region
      %s82 = sld [smem:[#allocation3]]
      %v83 = vld [vmem:[#allocation9] sm:$0xff]
      %v84 = vld [vmem:[#allocation9 + $0x8] sm:$0xff]
      %v85 = vld [vmem:[#allocation9 + $0x10] sm:$0xff]
      %v86 = vld [vmem:[#allocation9 + $0x18] sm:$0xff]
      %v87 = vld [vmem:[#allocation9 + $0x20] sm:$0xff]
      %v88 = vld [vmem:[#allocation9 + $0x28] sm:$0xff]
      %v89 = vld [vmem:[#allocation9 + $0x30] sm:$0xff]
      %v90 = vld [vmem:[#allocation9 + $0x38] sm:$0xff]
      %v91 = vld [vmem:[#allocation9 + $0x40] sm:$0xff]
      %v92 = vld [vmem:[#allocation9 + $0x48] sm:$0xff]
      %v93 = vld [vmem:[#allocation9 + $0x50] sm:$0xff]
      %v94 = vld [vmem:[#allocation9 + $0x58] sm:$0xff]
      %v95 = vld [vmem:[#allocation9 + $0x60] sm:$0xff]
      %v96 = vld [vmem:[#allocation9 + $0x68] sm:$0xff]
      %v97 = vld [vmem:[#allocation9 + $0x70] sm:$0xff]
      %v98 = vld [vmem:[#allocation9 + $0x78] sm:$0xff]
      %v99 = vld [vmem:[#allocation10] sm:$0xff]
      %v100 = vld [vmem:[#allocation10 + $0x8] sm:$0xff]
      %v101 = vld [vmem:[#allocation10 + $0x10] sm:$0xff]
      %v102 = vld [vmem:[#allocation10 + $0x18] sm:$0xff]
      %v103 = vld [vmem:[#allocation10 + $0x20] sm:$0xff]
      %v104 = vld [vmem:[#allocation10 + $0x28] sm:$0xff]
      %v105 = vld [vmem:[#allocation10 + $0x30] sm:$0xff]
      %v106 = vld [vmem:[#allocation10 + $0x38] sm:$0xff]
      %v107 = vld [vmem:[#allocation10 + $0x40] sm:$0xff]
      %v108 = vld [vmem:[#allocation10 + $0x48] sm:$0xff]
      %v109 = vld [vmem:[#allocation10 + $0x50] sm:$0xff]
      %v110 = vld [vmem:[#allocation10 + $0x58] sm:$0xff]
      %v111 = vld [vmem:[#allocation10 + $0x60] sm:$0xff]
      %v112 = vld [vmem:[#allocation10 + $0x68] sm:$0xff]
      %v113 = vld [vmem:[#allocation10 + $0x70] sm:$0xff]
      %v114 = vld [vmem:[#allocation10 + $0x78] sm:$0xff]
      %v115 = vsub.f32 %v83, %v99
      %v116 = vsub.f32 %v84, %v100
      %v117 = vsub.f32 %v85, %v101
      %v118 = vsub.f32 %v86, %v102
      %v119 = vsub.f32 %v87, %v103
      %v120 = vsub.f32 %v88, %v104
      %v121 = vsub.f32 %v89, %v105
      %v122 = vsub.f32 %v90, %v106
      %v123 = vsub.f32 %v91, %v107
      %v124 = vsub.f32 %v92, %v108
      %v125 = vsub.f32 %v93, %v109
      %v126 = vsub.f32 %v94, %v110
      %v127 = vsub.f32 %v95, %v111
      %v128 = vsub.f32 %v96, %v112
      %v129 = vsub.f32 %v97, %v113
      %v130 = vsub.f32 %v98, %v114
      %v131 = vstv %s82
      %v132 = vmul.f32 %v131, %v115
      %v133 = vmul.f32 %v131, %v116
      %v134 = vmul.f32 %v131, %v117
      %v135 = vmul.f32 %v131, %v118
      %v136 = vmul.f32 %v131, %v119
      %v137 = vmul.f32 %v131, %v120
      %v138 = vmul.f32 %v131, %v121
      %v139 = vmul.f32 %v131, %v122
      %v140 = vmul.f32 %v131, %v123
      %v141 = vmul.f32 %v131, %v124
      %v142 = vmul.f32 %v131, %v125
      %v143 = vmul.f32 %v131, %v126
      %v144 = vmul.f32 %v131, %v127
      %v145 = vmul.f32 %v131, %v128
      %v146 = vmul.f32 %v131, %v129
      %v147 = vmul.f32 %v131, %v130
      %v148 = vpack.c.bf16 %v133, %v132
      %v149 = vpack.c.bf16 %v135, %v134
      %v150 = vpack.c.bf16 %v137, %v136
      %v151 = vpack.c.bf16 %v139, %v138
      %v152 = vpack.c.bf16 %v141, %v140
      %v153 = vpack.c.bf16 %v143, %v142
      %v154 = vpack.c.bf16 %v145, %v144
      %v155 = vpack.c.bf16 %v147, %v146
      %156 = vst [vmem:[#allocation2] sm:$0xff] %v148
      %157 = vst [vmem:[#allocation2 + $0x8] sm:$0xff] %v149
      %158 = vst [vmem:[#allocation2 + $0x10] sm:$0xff] %v150
      %159 = vst [vmem:[#allocation2 + $0x18] sm:$0xff] %v151
      %160 = vst [vmem:[#allocation2 + $0x20] sm:$0xff] %v152
      %161 = vst [vmem:[#allocation2 + $0x28] sm:$0xff] %v153
      %162 = vst [vmem:[#allocation2 + $0x30] sm:$0xff] %v154
      %163 = vst [vmem:[#allocation2 + $0x38] sm:$0xff] %v155
    $region41: #{tpu_custom_call.1} parent=1 // pred_fallthru
      _
    %v164 = vld [vmem:[#allocation4] sm:$0xf]
    %v165 = vld [vmem:[#allocation4 + $0x4] sm:$0xf]
    %v166 = vld [vmem:[#allocation4 + $0x8] sm:$0xf]
    %v167 = vld [vmem:[#allocation4 + $0xc] sm:$0xf]
    %v168 = vld [vmem:[#allocation4 + $0x10] sm:$0xf]
    %v169 = vld [vmem:[#allocation4 + $0x14] sm:$0xf]
    %v170 = vld [vmem:[#allocation4 + $0x18] sm:$0xf]
    %v171 = vld [vmem:[#allocation4 + $0x1c] sm:$0xf]
    %v172 = vld [vmem:[#allocation4 + $0x20] sm:$0xf]
    %v173 = vld [vmem:[#allocation4 + $0x24] sm:$0xf]
    %v174 = vld [vmem:[#allocation4 + $0x28] sm:$0xf]
    %v175 = vld [vmem:[#allocation4 + $0x2c] sm:$0xf]
    %v176 = vld [vmem:[#allocation4 + $0x30] sm:$0xf]
    %v177 = vld [vmem:[#allocation4 + $0x34] sm:$0xf]
    %v178 = vld [vmem:[#allocation4 + $0x38] sm:$0xf]
    %v179 = vld [vmem:[#allocation4 + $0x3c] sm:$0xf]
    %v180 = vld [vmem:[#allocation2] sm:$0xff]
    %v181 = vld [vmem:[#allocation2 + $0x8] sm:$0xff]
    %v182 = vld [vmem:[#allocation2 + $0x10] sm:$0xff]
    %v183 = vld [vmem:[#allocation2 + $0x18] sm:$0xff]
    %v184 = vld [vmem:[#allocation2 + $0x20] sm:$0xff]
    %v185 = vld [vmem:[#allocation2 + $0x28] sm:$0xff]
    %v186 = vld [vmem:[#allocation2 + $0x30] sm:$0xff]
    %v187 = vld [vmem:[#allocation2 + $0x38] sm:$0xff]
    %v204 = vunpack.c.l.b16 %v164
    %v205 = vunpack.c.l.b16 %v165
    %v206 = vunpack.c.l.b16 %v166
    %v207 = vunpack.c.l.b16 %v167
    %v208 = vunpack.c.l.b16 %v168
    %v209 = vunpack.c.l.b16 %v169
    %v210 = vunpack.c.l.b16 %v170
    %v211 = vunpack.c.l.b16 %v171
    %v212 = vunpack.c.l.b16 %v172
    %v213 = vunpack.c.l.b16 %v173
    %v214 = vunpack.c.l.b16 %v174
    %v215 = vunpack.c.l.b16 %v175
    %v216 = vunpack.c.l.b16 %v176
    %v217 = vunpack.c.l.b16 %v177
    %v218 = vunpack.c.l.b16 %v178
    %v219 = vunpack.c.l.b16 %v179
    %v220 = vpack.c.b16 %v205, %v204
    %v221 = vpack.c.b16 %v207, %v206
    %v222 = vpack.c.b16 %v209, %v208
    %v223 = vpack.c.b16 %v211, %v210
    %v224 = vpack.c.b16 %v213, %v212
    %v225 = vpack.c.b16 %v215, %v214
    %v226 = vpack.c.b16 %v217, %v216
    %v227 = vpack.c.b16 %v219, %v218
    %236 = vmatprep.subr.bf16.mxu0 0
    %237 = vmatpush1.bf16.msra.mxu0 %v180
    %238 = vmatprep.subr.bf16.mxu0 0
    %239 = vmatpush1.bf16.msra.mxu0 %v181
    %240 = vmatprep.subr.bf16.mxu0 0
    %241 = vmatpush1.bf16.msra.mxu0 %v182
    %242 = vmatprep.subr.bf16.mxu0 0
    %243 = vmatpush1.bf16.msra.mxu0 %v183
    %244 = vmatprep.subr.bf16.mxu0 0
    %245 = vmatpush1.bf16.msra.mxu0 %v184
    %246 = vmatprep.subr.bf16.mxu0 0
    %247 = vmatpush1.bf16.msra.mxu0 %v185
    %248 = vmatprep.subr.bf16.mxu0 0
    %249 = vmatpush1.bf16.msra.mxu0 %v186
    %250 = vmatprep.subr.bf16.mxu0 0
    %251 = vmatpush1.bf16.msra.mxu0 %v187
    %252 = vmatprep.subr.bf16.mxu0 0
    %253 = vmatpush1.bf16.msra.mxu0 0
    %254 = vmatprep.subr.bf16.mxu0 0
    %255 = vmatpush1.bf16.msra.mxu0 0
    %256 = vmatprep.subr.bf16.mxu0 0
    %257 = vmatpush1.bf16.msra.mxu0 0
    %258 = vmatprep.subr.bf16.mxu0 0
    %259 = vmatpush1.bf16.msra.mxu0 0
    %260 = vmatprep.subr.bf16.mxu0 0
    %261 = vmatpush1.bf16.msra.mxu0 0
    %262 = vmatprep.subr.bf16.mxu0 0
    %263 = vmatpush1.bf16.msra.mxu0 0
    %264 = vmatprep.subr.bf16.mxu0 0
    %265 = vmatpush1.bf16.msra.mxu0 0
    %266 = vmatprep.subr.bf16.mxu0 0
    %267 = vmatpush1.bf16.msra.mxu0 0
    %268 = vmatprep.mubr.bf16.mxu0 0
    %269 = vmatmul.mubr.bf16.gmra.mrb[0].mxu0 %v220
    %v270 = vpop.f32.mrb[0].mxu0
    %v271 = vadd.f32 0.0, %v270
    %v272 = vpop.f32.mrb[0].mxu0
    %v273 = vpop.f32.mrb[0].mxu0
    %v274 = vadd.f32 0.0, %v273
    %v275 = vpop.f32.mrb[0].mxu0
    %276 = vmatprep.mubr.bf16.mxu0 0
    %277 = vmatmul.mubr.bf16.gmra.mrb[0].mxu0 %v221
    %v278 = vpop.f32.mrb[0].mxu0
    %v279 = vadd.f32 0.0, %v278
    %v280 = vpop.f32.mrb[0].mxu0
    %v281 = vpop.f32.mrb[0].mxu0
    %v282 = vadd.f32 0.0, %v281
    %v283 = vpop.f32.mrb[0].mxu0
    %284 = vmatprep.mubr.bf16.mxu0 0
    %285 = vmatmul.mubr.bf16.gmra.mrb[0].mxu0 %v222
    %v286 = vpop.f32.mrb[0].mxu0
    %v287 = vadd.f32 0.0, %v286
    %v288 = vpop.f32.mrb[0].mxu0
    %v289 = vpop.f32.mrb[0].mxu0
    %v290 = vadd.f32 0.0, %v289
    %v291 = vpop.f32.mrb[0].mxu0
    %292 = vmatprep.mubr.bf16.mxu0 0
    %293 = vmatmul.mubr.bf16.gmra.mrb[0].mxu0 %v223
    %v294 = vpop.f32.mrb[0].mxu0
    %v295 = vadd.f32 0.0, %v294
    %v296 = vpop.f32.mrb[0].mxu0
    %v297 = vpop.f32.mrb[0].mxu0
    %v298 = vadd.f32 0.0, %v297
    %v299 = vpop.f32.mrb[0].mxu0
    %300 = vmatprep.mubr.bf16.mxu0 0
    %301 = vmatmul.mubr.bf16.gmra.mrb[0].mxu0 %v224
    %v302 = vpop.f32.mrb[0].mxu0
    %v303 = vadd.f32 0.0, %v302
    %v304 = vpop.f32.mrb[0].mxu0
    %v305 = vpop.f32.mrb[0].mxu0
    %v306 = vadd.f32 0.0, %v305
    %v307 = vpop.f32.mrb[0].mxu0
    %308 = vmatprep.mubr.bf16.mxu0 0
    %309 = vmatmul.mubr.bf16.gmra.mrb[0].mxu0 %v225
    %v310 = vpop.f32.mrb[0].mxu0
    %v311 = vadd.f32 0.0, %v310
    %v312 = vpop.f32.mrb[0].mxu0
    %v313 = vpop.f32.mrb[0].mxu0
    %v314 = vadd.f32 0.0, %v313
    %v315 = vpop.f32.mrb[0].mxu0
    %316 = vmatprep.mubr.bf16.mxu0 0
    %317 = vmatmul.mubr.bf16.gmra.mrb[0].mxu0 %v226
    %v318 = vpop.f32.mrb[0].mxu0
    %v319 = vadd.f32 0.0, %v318
    %v320 = vpop.f32.mrb[0].mxu0
    %v321 = vpop.f32.mrb[0].mxu0
    %v322 = vadd.f32 0.0, %v321
    %v323 = vpop.f32.mrb[0].mxu0
    %324 = vmatprep.mubr.bf16.mxu0 0
    %325 = vmatmul.mubr.bf16.gmra.mrb[0].mxu0 %v227
    %v326 = vpop.f32.mrb[0].mxu0
    %v327 = vadd.f32 0.0, %v326
    %v328 = vpop.f32.mrb[0].mxu0
    %v329 = vpop.f32.mrb[0].mxu0
    %v330 = vadd.f32 0.0, %v329
    %v331 = vpop.f32.mrb[0].mxu0
    %332 = vdwg.mxu0
    %v333 = vld [vmem:[#allocation7] sm:$0xff]
    %v334 = vld [vmem:[#allocation7 + $0x8] sm:$0xff]
    %v335 = vld [vmem:[#allocation7 + $0x10] sm:$0xff]
    %v336 = vld [vmem:[#allocation7 + $0x18] sm:$0xff]
    %v337 = vld [vmem:[#allocation7 + $0x20] sm:$0xff]
    %v338 = vld [vmem:[#allocation7 + $0x28] sm:$0xff]
    %v339 = vld [vmem:[#allocation7 + $0x30] sm:$0xff]
    %v340 = vld [vmem:[#allocation7 + $0x38] sm:$0xff]
    %v341 = vld [vmem:[#allocation7 + $0x40] sm:$0xff]
    %v342 = vld [vmem:[#allocation7 + $0x48] sm:$0xff]
    %v343 = vld [vmem:[#allocation7 + $0x50] sm:$0xff]
    %v344 = vld [vmem:[#allocation7 + $0x58] sm:$0xff]
    %v345 = vld [vmem:[#allocation7 + $0x60] sm:$0xff]
    %v346 = vld [vmem:[#allocation7 + $0x68] sm:$0xff]
    %v347 = vld [vmem:[#allocation7 + $0x70] sm:$0xff]
    %v348 = vld [vmem:[#allocation7 + $0x78] sm:$0xff]
    %v349 = vadd.f32 %v333, %v271
    %v350 = vadd.f32 %v334, %v274
    %v351 = vadd.f32 %v335, %v279
    %v352 = vadd.f32 %v336, %v282
    %v353 = vadd.f32 %v337, %v287
    %v354 = vadd.f32 %v338, %v290
    %v355 = vadd.f32 %v339, %v295
    %v356 = vadd.f32 %v340, %v298
    %v357 = vadd.f32 %v341, %v303
    %v358 = vadd.f32 %v342, %v306
    %v359 = vadd.f32 %v343, %v311
    %v360 = vadd.f32 %v344, %v314
    %v361 = vadd.f32 %v345, %v319
    %v362 = vadd.f32 %v346, %v322
    %v363 = vadd.f32 %v347, %v327
    %v364 = vadd.f32 %v348, %v330
    %365 = vst [vmem:[#allocation12] sm:$0xff] %v349
    %366 = vst [vmem:[#allocation12 + $0x8] sm:$0xff] %v350
    %367 = vst [vmem:[#allocation12 + $0x10] sm:$0xff] %v351
    %368 = vst [vmem:[#allocation12 + $0x18] sm:$0xff] %v352
    %369 = vst [vmem:[#allocation12 + $0x20] sm:$0xff] %v353
    %370 = vst [vmem:[#allocation12 + $0x28] sm:$0xff] %v354
    %371 = vst [vmem:[#allocation12 + $0x30] sm:$0xff] %v355
    %372 = vst [vmem:[#allocation12 + $0x38] sm:$0xff] %v356
    %373 = vst [vmem:[#allocation12 + $0x40] sm:$0xff] %v357
    %374 = vst [vmem:[#allocation12 + $0x48] sm:$0xff] %v358
    %375 = vst [vmem:[#allocation12 + $0x50] sm:$0xff] %v359
    %376 = vst [vmem:[#allocation12 + $0x58] sm:$0xff] %v360
    %377 = vst [vmem:[#allocation12 + $0x60] sm:$0xff] %v361
    %378 = vst [vmem:[#allocation12 + $0x68] sm:$0xff] %v362
    %379 = vst [vmem:[#allocation12 + $0x70] sm:$0xff] %v363
    %380 = vst [vmem:[#allocation12 + $0x78] sm:$0xff] %v364
    // Predicated region
    $region42: #{tpu_custom_call.1} parent=1 // pred_check
      _
    $region43: #{tpu_custom_call.1} parent=1 // pred_check_branch
      %382 = sbr.rel (0) target = $region45
    $region44: #{tpu_custom_call.1} parent=1 // pred_region
      %s384 = ssub.s32 2048, 2048
      %385 = vsyncadd [#allocation6], %s384
      %s386 = sshll.u32 [#allocation12], 4
      %s387 = int_to_ptr.vmem [resolvable:$true] %s386
      %392 = dma.vmem_to_hbm [thread:$0]  %s387, 2048, %s5, [#allocation6], 128, 128, 8
    $region45: #{tpu_custom_call.1} parent=1 // pred_fallthru
      _
    // Predicated region
    $region46: #{tpu_custom_call.1} parent=1 // pred_check
      _
    $region47: #{tpu_custom_call.1} parent=1 // pred_check_branch
      %394 = sbr.rel (0) target = $region49
    $region48: #{tpu_custom_call.1} parent=1 // pred_region
      %395 = dma.done [#allocation6], 2048
    $region49: #{tpu_custom_call.1} parent=1 // pred_fallthru
      _
    %396 = vsyncpa [#allocation5], 1
    %397 = vsyncpa [#allocation8], 1
    %398 = vsyncpa [#allocation11], 1
    %399 = vsyncpa [#allocation6], 1

</llo_original>
